<compile_context>
chip_gen: v6e
topology: v6e:2x2x1
jax: 0.10.0
libtpu: 0.0.40
codegen_flags: <defaults>
</compile_context>

<pallas_src>
import jax
import jax.numpy as jnp
from jax.experimental import pallas as pl
from jax.experimental.pallas import tpu as pltpu


def _leaky_relu(x, slope=0.2):
    # For 0 < slope < 1: LeakyReLU(x) == max(x, slope*x) -> one vmul + vmax.
    return jnp.maximum(x, slope * x)


def _disc_kernel(x_ref, w1_ref, b1_ref, w2_ref, b2_ref, w3_ref, b3_ref, o_ref):
    # x_ref : (TR, K_pad)   bf16
    # w1_ref: (K_pad, 256)  bf16    b1_ref: (1, 256) f32
    # w2_ref: (256, 256)    bf16    b2_ref: (1, 256) f32
    # w3_ref: (1, 256)      f32     b3_ref: (1, 1)   f32 (SMEM scalar)
    # o_ref : (TR, 1)       f32
    h = jnp.dot(x_ref[...], w1_ref[...], preferred_element_type=jnp.float32)
    h = _leaky_relu(h + b1_ref[...])
    # Dropout(0.2): identity in eval mode.

    h = jnp.dot(h.astype(jnp.bfloat16), w2_ref[...],
                preferred_element_type=jnp.float32)
    h = _leaky_relu(h + b2_ref[...])
    # Dropout(0.2): identity in eval mode.

    # Final Linear(256, 1): an N=1 matmul would use 1/256 of the MXU lanes and
    # produce lane-sparse stores -> do VPU multiply + cross-lane (XLU) reduce.
    out = jnp.sum(h * w3_ref[...], axis=-1, keepdims=True) + b3_ref[0, 0]
    o_ref[...] = out.astype(o_ref.dtype)


def _round_up(x, m):
    return (x + m - 1) // m * m


def discriminator_forward(x, params, pac, *, row_tile=512):
    """x: (batch, input_dim). Returns (batch // pac, 1) float32 (eval mode)."""
    batch, input_dim = x.shape
    assert batch % pac == 0, "batch must be divisible by pac"
    rows = batch // pac
    k = input_dim * pac
    hidden = 256

    w1, b1, w2, b2, w3, b3 = params

    # PyTorch: x.view(batch // pac, -1) on a contiguous row-major tensor.
    x_folded = jnp.reshape(x, (rows, k))

    # Pad contraction dim to a lane multiple (extra columns are zeros: exact).
    k_pad = _round_up(k, 128)
    # Row tile: multiple of 8, capped; small enough for v7x's 64 MiB VMEM.
    tr = min(row_tile, _round_up(rows, 8))
    rows_pad = _round_up(rows, tr)

    x_p = jnp.pad(x_folded, ((0, rows_pad - rows), (0, k_pad - k)))
    w1_p = jnp.pad(w1, ((0, k_pad - k), (0, 0)))

    # bf16 MXU inputs, f32 accumulation inside the kernel.
    x_bf = x_p.astype(jnp.bfloat16)
    w1_bf = w1_p.astype(jnp.bfloat16)
    w2_bf = w2.astype(jnp.bfloat16)
    b1_f = b1.reshape(1, hidden).astype(jnp.float32)
    b2_f = b2.reshape(1, hidden).astype(jnp.float32)
    w3_row = w3.reshape(1, hidden).astype(jnp.float32)  # (256,1) -> (1,256)
    b3_s = b3.reshape(1, 1).astype(jnp.float32)

    grid = (rows_pad // tr,)

    # VMEM budget derived from tile sizes (+ headroom), clamped well under the
    # smallest per-TC VMEM (v7x: 64 MiB physical).
    vmem_bytes = (
        2 * tr * k_pad * 2                       # double-buffered x tiles
        + k_pad * hidden * 2 + hidden * hidden * 2  # resident bf16 weights
        + 4 * tr * hidden * 4                    # f32 intermediates
        + 2 * tr * 4                             # double-buffered out tiles
    )
    vmem_limit = int(min(max(4 * vmem_bytes, 8 << 20), 48 << 20))

    grid_spec = pltpu.PrefetchScalarGridSpec(
        num_scalar_prefetch=0,
        grid=grid,
        in_specs=[
            pl.BlockSpec((tr, k_pad), lambda i: (i, 0)),        # x tile
            pl.BlockSpec((k_pad, hidden), lambda i: (0, 0)),    # w1 (resident)
            pl.BlockSpec((1, hidden), lambda i: (0, 0)),        # b1
            pl.BlockSpec((hidden, hidden), lambda i: (0, 0)),   # w2 (resident)
            pl.BlockSpec((1, hidden), lambda i: (0, 0)),        # b2
            pl.BlockSpec((1, hidden), lambda i: (0, 0)),        # w3 row
            pl.BlockSpec(memory_space=pltpu.MemorySpace.SMEM),  # b3 scalar
        ],
        out_specs=pl.BlockSpec((tr, 1), lambda i: (i, 0)),
    )

    out_padded = pl.pallas_call(
        _disc_kernel,
        out_shape=jax.ShapeDtypeStruct((rows_pad, 1), jnp.float32),
        grid_spec=grid_spec,
        compiler_params=pltpu.CompilerParams(
            dimension_semantics=("parallel",),
            vmem_limit_bytes=vmem_limit,
        ),
    )(x_bf, w1_bf, b1_f, w2_bf, b2_f, w3_row, b3_s)

    return out_padded[:rows]


def init_params(key, input_dim, pac, hidden=256):
    """Deterministic parameter init (PyTorch Linear-style uniform bounds)."""
    total_in = input_dim * pac
    ks = jax.random.split(key, 6)

    def lin(kw, kb, fan_in, fan_out):
        bound = 1.0 / jnp.sqrt(jnp.float32(fan_in))
        w = jax.random.uniform(kw, (fan_in, fan_out), jnp.float32, -bound, bound)
        b = jax.random.uniform(kb, (1, fan_out), jnp.float32, -bound, bound)
        return w, b

    w1, b1 = lin(ks[0], ks[1], total_in, hidden)
    w2, b2 = lin(ks[2], ks[3], hidden, hidden)
    w3, b3 = lin(ks[4], ks[5], hidden, 1)
    return (w1, b1, w2, b2, w3, b3)


def _reference_forward(x, params, pac):
    """Plain-JAX f32 reference with identical semantics (eval-mode dropout)."""
    w1, b1, w2, b2, w3, b3 = params
    rows = x.shape[0] // pac
    h = jnp.reshape(x, (rows, -1))
    h = _leaky_relu(h @ w1 + b1)
    h = _leaky_relu(h @ w2 + b2)
    return h @ w3 + b3


if __name__ == "__main__":
    key = jax.random.PRNGKey(0)
    k_x, k_p, k_x2 = jax.random.split(key, 3)

    input_dim = 16
    pac = 4

    params = init_params(k_p, input_dim, pac)

    # Case 1: tiny batch (single grid step, padded rows).
    batch = 8  # -> 2 packed rows
    x = jax.random.normal(k_x, (batch, input_dim), dtype=jnp.float32)
    out = jax.block_until_ready(discriminator_forward(x, params, pac))
    ref = _reference_forward(x, params, pac)
    assert out.shape == (batch // pac, 1), out.shape
    assert jnp.allclose(out, ref, atol=2e-2, rtol=2e-2), (out, ref)

    # Case 2: multiple row tiles (exercises the grid / pipelining path).
    batch2 = 128  # -> 32 packed rows, row_tile=8 -> grid of 4
    x2 = jax.random.normal(k_x2, (batch2, input_dim), dtype=jnp.float32)
    out2 = jax.block_until_ready(
        discriminator_forward(x2, params, pac, row_tile=8))
    ref2 = _reference_forward(x2, params, pac)
    assert out2.shape == (batch2 // pac, 1), out2.shape
    assert jnp.allclose(out2, ref2, atol=2e-2, rtol=2e-2), (out2, ref2)

    print("KERNEL_OK")
</pallas_src>

<mosaic_0001>
module attributes {stable_mosaic.version = 11 : i64} {
  func.func @_disc_kernel(%arg0: i32, %arg1: memref<8x128xbf16, #tpu.memory_space<vmem>>, %arg2: memref<128x256xbf16, #tpu.memory_space<vmem>>, %arg3: memref<1x256xf32, #tpu.memory_space<vmem>>, %arg4: memref<256x256xbf16, #tpu.memory_space<vmem>>, %arg5: memref<1x256xf32, #tpu.memory_space<vmem>>, %arg6: memref<1x256xf32, #tpu.memory_space<vmem>>, %arg7: memref<1x1xf32, #tpu.memory_space<smem>>, %arg8: memref<8x1xf32, #tpu.memory_space<vmem>>) attributes {dimension_semantics = [#tpu.dimension_semantics<parallel>], iteration_bounds = array<i64: 1>, scalar_prefetch = 0 : i64, scratch_operands = 0 : i64, tpu.core_type = #tpu.core_type<tc>, window_params = [{transform_indices = @transform_0, window_bounds = array<i64: 8, 128>}, {pipeline_mode = #tpu.pipeline_mode<synchronous>, transform_indices = @transform_1, window_bounds = array<i64: 128, 256>}, {pipeline_mode = #tpu.pipeline_mode<synchronous>, transform_indices = @transform_2, window_bounds = array<i64: 1, 256>}, {pipeline_mode = #tpu.pipeline_mode<synchronous>, transform_indices = @transform_3, window_bounds = array<i64: 256, 256>}, {pipeline_mode = #tpu.pipeline_mode<synchronous>, transform_indices = @transform_4, window_bounds = array<i64: 1, 256>}, {pipeline_mode = #tpu.pipeline_mode<synchronous>, transform_indices = @transform_5, window_bounds = array<i64: 1, 256>}, {transform_indices = @transform_6, window_bounds = array<i64: 1, 1>}, {transform_indices = @transform_7, window_bounds = array<i64: 8, 1>}]} {
    %c0 = arith.constant 0 : index
    %c0_0 = arith.constant 0 : index
    %0 = vector.load %arg1[%c0, %c0_0] : memref<8x128xbf16, #tpu.memory_space<vmem>>, vector<8x128xbf16>
    %c0_1 = arith.constant 0 : index
    %c0_2 = arith.constant 0 : index
    %1 = vector.load %arg2[%c0_1, %c0_2] : memref<128x256xbf16, #tpu.memory_space<vmem>>, vector<128x256xbf16>
    %cst = arith.constant dense<0.000000e+00> : vector<8x256xf32>
    %2 = tpu.matmul %0, %1, %cst {dimension_numbers = #tpu.dot_dimension_numbers<[1], [0], [0], [1], [0, 0, 1, 1], [], []>} : vector<8x128xbf16>, vector<128x256xbf16>, vector<8x256xf32> -> vector<8x256xf32>
    %c0_3 = arith.constant 0 : index
    %c0_4 = arith.constant 0 : index
    %3 = vector.load %arg3[%c0_3, %c0_4] : memref<1x256xf32, #tpu.memory_space<vmem>>, vector<1x256xf32>
    %4 = vector.broadcast %3 : vector<1x256xf32> to vector<8x256xf32>
    %5 = arith.addf %2, %4 : vector<8x256xf32>
    %cst_5 = arith.constant 2.000000e-01 : f32
    %6 = vector.broadcast %cst_5 : f32 to vector<8x256xf32>
    %7 = arith.mulf %6, %5 : vector<8x256xf32>
    %8 = arith.maximumf %5, %7 : vector<8x256xf32>
    %9 = arith.truncf %8 : vector<8x256xf32> to vector<8x256xbf16>
    %c0_6 = arith.constant 0 : index
    %c0_7 = arith.constant 0 : index
    %10 = vector.load %arg4[%c0_6, %c0_7] : memref<256x256xbf16, #tpu.memory_space<vmem>>, vector<256x256xbf16>
    %cst_8 = arith.constant dense<0.000000e+00> : vector<8x256xf32>
    %11 = tpu.matmul %9, %10, %cst_8 {dimension_numbers = #tpu.dot_dimension_numbers<[1], [0], [0], [1], [0, 0, 1, 1], [], []>} : vector<8x256xbf16>, vector<256x256xbf16>, vector<8x256xf32> -> vector<8x256xf32>
    %c0_9 = arith.constant 0 : index
    %c0_10 = arith.constant 0 : index
    %12 = vector.load %arg5[%c0_9, %c0_10] : memref<1x256xf32, #tpu.memory_space<vmem>>, vector<1x256xf32>
    %13 = vector.broadcast %12 : vector<1x256xf32> to vector<8x256xf32>
    %14 = arith.addf %11, %13 : vector<8x256xf32>
    %cst_11 = arith.constant 2.000000e-01 : f32
    %15 = vector.broadcast %cst_11 : f32 to vector<8x256xf32>
    %16 = arith.mulf %15, %14 : vector<8x256xf32>
    %17 = arith.maximumf %14, %16 : vector<8x256xf32>
    %c0_12 = arith.constant 0 : index
    %c0_13 = arith.constant 0 : index
    %18 = vector.load %arg6[%c0_12, %c0_13] : memref<1x256xf32, #tpu.memory_space<vmem>>, vector<1x256xf32>
    %19 = vector.broadcast %18 : vector<1x256xf32> to vector<8x256xf32>
    %20 = arith.mulf %17, %19 : vector<8x256xf32>
    %cst_14 = arith.constant dense<0.000000e+00> : vector<8xf32>
    %21 = vector.multi_reduction <add>, %20, %cst_14 [1] : vector<8x256xf32> to vector<8xf32>
    %22 = vector.shape_cast %21 : vector<8xf32> to vector<8x1xf32>
    %c0_15 = arith.constant 0 : index
    %c0_16 = arith.constant 0 : index
    %23 = memref.load %arg7[%c0_15, %c0_16] : memref<1x1xf32, #tpu.memory_space<smem>>
    %24 = vector.broadcast %23 : f32 to vector<8x1xf32>
    %25 = arith.addf %22, %24 : vector<8x1xf32>
    %c0_17 = arith.constant 0 : index
    %c0_18 = arith.constant 0 : index
    %26 = vector.load %arg8[%c0_17, %c0_18] : memref<8x1xf32, #tpu.memory_space<vmem>>, vector<8x1xf32>
    tpu.vector_store %arg8[%c0_17, %c0_18], %25 {strides = array<i32>} : memref<8x1xf32, #tpu.memory_space<vmem>>, vector<8x1xf32>,
    return
  }
  func.func @transform_0(%arg0: i32) -> (i32, i32) {
    %c0_i32 = arith.constant 0 : i32
    %c0_i32_0 = arith.constant 0 : i32
    return %arg0, %c0_i32 : i32, i32
  }
  func.func @transform_1(%arg0: i32) -> (i32, i32) {
    %c0_i32 = arith.constant 0 : i32
    %c0_i32_0 = arith.constant 0 : i32
    %c0_i32_1 = arith.constant 0 : i32
    return %c0_i32, %c0_i32_0 : i32, i32
  }
  func.func @transform_2(%arg0: i32) -> (i32, i32) {
    %c0_i32 = arith.constant 0 : i32
    %c0_i32_0 = arith.constant 0 : i32
    %c0_i32_1 = arith.constant 0 : i32
    return %c0_i32, %c0_i32_0 : i32, i32
  }
  func.func @transform_3(%arg0: i32) -> (i32, i32) {
    %c0_i32 = arith.constant 0 : i32
    %c0_i32_0 = arith.constant 0 : i32
    %c0_i32_1 = arith.constant 0 : i32
    return %c0_i32, %c0_i32_0 : i32, i32
  }
  func.func @transform_4(%arg0: i32) -> (i32, i32) {
    %c0_i32 = arith.constant 0 : i32
    %c0_i32_0 = arith.constant 0 : i32
    %c0_i32_1 = arith.constant 0 : i32
    return %c0_i32, %c0_i32_0 : i32, i32
  }
  func.func @transform_5(%arg0: i32) -> (i32, i32) {
    %c0_i32 = arith.constant 0 : i32
    %c0_i32_0 = arith.constant 0 : i32
    %c0_i32_1 = arith.constant 0 : i32
    return %c0_i32, %c0_i32_0 : i32, i32
  }
  func.func @transform_6(%arg0: i32) -> (i32, i32) {
    %c0_i32 = arith.constant 0 : i32
    %c0_i32_0 = arith.constant 0 : i32
    %c0_i32_1 = arith.constant 0 : i32
    return %c0_i32, %c0_i32_0 : i32, i32
  }
  func.func @transform_7(%arg0: i32) -> (i32, i32) {
    %c0_i32 = arith.constant 0 : i32
    %c0_i32_0 = arith.constant 0 : i32
    return %arg0, %c0_i32 : i32, i32
  }
}

</mosaic_0001>

<llo_original>
// kernel: tpu_custom_call.1
$region0: #{tpu_custom_call.1}
  #allocation0 [shape = 'u32[]', space=smem, size = 0x4, offset = 0x4, fixed_abs, tag = 'smem constant byte address 0x4 - core index']
  #allocation1 [shape = 'u32[144,128]{1,0:T(1,128)}', space=vmem, size = 0x12000, scoped, tag = 'internal scratch']
  #allocation2 [shape = 'f32[1,1]{1,0:T(1,128)S(6)}', space=smem, size = 0x200, scoped, tag = 'scoped memory for tpu_custom_call.1']
  %s0 = inlined_call_operand.hbm [shape: bf16[8,128], index: 0, kind: input, shape index: {}]
  %s1 = inlined_call_operand.hbm [shape: bf16[128,256], index: 1, kind: input, shape index: {}]
  %s2 = inlined_call_operand.vmem [shape: f32[1,256], index: 2, kind: input, shape index: {}]
  %s3 = inlined_call_operand.hbm [shape: bf16[256,256], index: 3, kind: input, shape index: {}]
  %s4 = inlined_call_operand.vmem [shape: f32[1,256], index: 4, kind: input, shape index: {}]
  %s5 = inlined_call_operand.vmem [shape: f32[1,256], index: 5, kind: input, shape index: {}]
  %s6 = inlined_call_operand.<no memory space> [shape: f32[1,1], index: 6, kind: input, shape index: {}]
  %s7 = inlined_call_operand.vmem [shape: f32[8,1], index: 7, kind: output, shape index: {}]
  %s8 = sld [smem:[#allocation0]]
  $region50: #{tpu_custom_call.1} parent=0
    _
  %s10 = ssub.s32 1, %s8
  %s11 = scalar_select 0, %s10, %s8
  %12 = sst [smem:[#allocation2]] %s6
  $region1: #{tpu_custom_call.1} parent=0
    #allocation3 [shape = 'u8[2048]{0}', space=vmem, size = 0x800, scoped, tag = 'input window, operand 0, single buffered']
    #allocation4 [shape = 's32[1]{0}', space=sflag, size = 0x4, scoped, tag = 'scoped memory for tpu_custom_call.1']
    #allocation5 [shape = 'u8[65536]{0}', space=vmem, size = 0x10000, scoped, tag = 'input window, operand 1, single buffered']
    #allocation6 [shape = 's32[1]{0}', space=sflag, size = 0x4, scoped, tag = 'scoped memory for tpu_custom_call.1']
    #allocation7 [shape = 'u8[131072]{0}', space=vmem, size = 0x20000, scoped, tag = 'input window, operand 3, single buffered']
    %13 = vsyncpa [#allocation4], 0
    %14 = vsyncpa [#allocation6], 0
    // Predicated region
    $region2: #{tpu_custom_call.1} parent=1 // pred_check
      _
    $region3: #{tpu_custom_call.1} parent=1 // pred_check_branch
      %16 = sbr.rel (0) target = $region5
    $region4: #{tpu_custom_call.1} parent=1 // pred_region
      %s18 = ssub.s32 64, 64
      %19 = vsyncadd [#allocation4], %s18
      %s21 = sshll.u32 [#allocation3], 4
      %s22 = int_to_ptr.vmem [resolvable:$true] %s21
      %24 = dma.hbm_to_vmem [thread:$0]  %s0, 64, %s22, [#allocation4]
    $region5: #{tpu_custom_call.1} parent=1 // pred_fallthru
      _
    // Predicated region
    $region6: #{tpu_custom_call.1} parent=1 // pred_check
      _
    $region7: #{tpu_custom_call.1} parent=1 // pred_check_branch
      %26 = sbr.rel (0) target = $region9
    $region8: #{tpu_custom_call.1} parent=1 // pred_region
      %s28 = ssub.s32 2048, 2048
      %29 = vsyncadd [#allocation6], %s28
      %s30 = sshll.u32 [#allocation5], 4
      %s31 = int_to_ptr.vmem [resolvable:$true] %s30
      %36 = dma.hbm_to_vmem [thread:$0]  %s1, 2048, %s31, [#allocation6], 128, 128, 8
    $region9: #{tpu_custom_call.1} parent=1 // pred_fallthru
      _
    // Predicated region
    $region10: #{tpu_custom_call.1} parent=1 // pred_check
      _
    $region11: #{tpu_custom_call.1} parent=1 // pred_check_branch
      %38 = sbr.rel (0) target = $region13
    $region12: #{tpu_custom_call.1} parent=1 // pred_region
      _
    $region13: #{tpu_custom_call.1} parent=1 // pred_fallthru
      _
    // Predicated region
    $region14: #{tpu_custom_call.1} parent=1 // pred_check
      _
    $region15: #{tpu_custom_call.1} parent=1 // pred_check_branch
      %40 = sbr.rel (0) target = $region17
    $region16: #{tpu_custom_call.1} parent=1 // pred_region
      %s42 = ssub.s32 4096, 4096
      %43 = vsyncadd [#allocation6], %s42
      %s44 = sshll.u32 [#allocation7], 4
      %s45 = int_to_ptr.vmem [resolvable:$true] %s44
      %50 = dma.hbm_to_vmem [thread:$0]  %s3, 4096, %s45, [#allocation6], 128, 128, 8
    $region17: #{tpu_custom_call.1} parent=1 // pred_fallthru
      _
    // Predicated region
    $region18: #{tpu_custom_call.1} parent=1 // pred_check
      _
    $region19: #{tpu_custom_call.1} parent=1 // pred_check_branch
      %52 = sbr.rel (0) target = $region21
    $region20: #{tpu_custom_call.1} parent=1 // pred_region
      _
    $region21: #{tpu_custom_call.1} parent=1 // pred_fallthru
      _
    // Predicated region
    $region22: #{tpu_custom_call.1} parent=1 // pred_check
      _
    $region23: #{tpu_custom_call.1} parent=1 // pred_check_branch
      %54 = sbr.rel (0) target = $region25
    $region24: #{tpu_custom_call.1} parent=1 // pred_region
      _
    $region25: #{tpu_custom_call.1} parent=1 // pred_fallthru
      _
    // Predicated region
    $region26: #{tpu_custom_call.1} parent=1 // pred_check
      _
    $region27: #{tpu_custom_call.1} parent=1 // pred_check_branch
      %56 = sbr.rel (0) target = $region29
    $region28: #{tpu_custom_call.1} parent=1 // pred_region
      _
    $region29: #{tpu_custom_call.1} parent=1 // pred_fallthru
      _
    // Predicated region
    $region30: #{tpu_custom_call.1} parent=1 // pred_check
      _
    $region31: #{tpu_custom_call.1} parent=1 // pred_check_branch
      %58 = sbr.rel (0) target = $region33
    $region32: #{tpu_custom_call.1} parent=1 // pred_region
      %59 = dma.done [#allocation4], 64
    $region33: #{tpu_custom_call.1} parent=1 // pred_fallthru
      _
    // Predicated region
    $region34: #{tpu_custom_call.1} parent=1 // pred_check
      _
    $region35: #{tpu_custom_call.1} parent=1 // pred_check_branch
      %61 = sbr.rel (0) target = $region37
    $region36: #{tpu_custom_call.1} parent=1 // pred_region
      %62 = dma.done [#allocation6], 2048
    $region37: #{tpu_custom_call.1} parent=1 // pred_fallthru
      _
    // Predicated region
    $region38: #{tpu_custom_call.1} parent=1 // pred_check
      _
    $region39: #{tpu_custom_call.1} parent=1 // pred_check_branch
      %64 = sbr.rel (0) target = $region41
    $region40: #{tpu_custom_call.1} parent=1 // pred_region
      %65 = dma.done [#allocation6], 4096
    $region41: #{tpu_custom_call.1} parent=1 // pred_fallthru
      _
    %v67 = vld [vmem:[#allocation3] sm:$0xf]
    %v68 = vld [vmem:[#allocation5] sm:$0xff]
    %v69 = vld [vmem:[#allocation5 + $0x8] sm:$0xff]
    %v70 = vld [vmem:[#allocation5 + $0x10] sm:$0xff]
    %v71 = vld [vmem:[#allocation5 + $0x18] sm:$0xff]
    %v72 = vld [vmem:[#allocation5 + $0x20] sm:$0xff]
    %v73 = vld [vmem:[#allocation5 + $0x28] sm:$0xff]
    %v74 = vld [vmem:[#allocation5 + $0x30] sm:$0xff]
    %v75 = vld [vmem:[#allocation5 + $0x38] sm:$0xff]
    %v76 = vld [vmem:[#allocation5 + $0x40] sm:$0xff]
    %v77 = vld [vmem:[#allocation5 + $0x48] sm:$0xff]
    %v78 = vld [vmem:[#allocation5 + $0x50] sm:$0xff]
    %v79 = vld [vmem:[#allocation5 + $0x58] sm:$0xff]
    %v80 = vld [vmem:[#allocation5 + $0x60] sm:$0xff]
    %v81 = vld [vmem:[#allocation5 + $0x68] sm:$0xff]
    %v82 = vld [vmem:[#allocation5 + $0x70] sm:$0xff]
    %v83 = vld [vmem:[#allocation5 + $0x78] sm:$0xff]
    %v84 = vld [vmem:[%s2] sm:$0x3]
    %v86 = vlaneseq
    %v87 = vshrl.u32 %v86, 7
    %v88 = vsub.s32 0, %v87
    %v89 = vrot.slane %v84, %v88
    %v90 = vlaneseq
    %v91 = vshrl.u32 %v90, 7
    %v92 = vsub.s32 1, %v91
    %v93 = vrot.slane %v84, %v92
    %v112 = vunpack.c.l.b16 %v68
    %v113 = vunpack.c.h.b16 %v68
    %v114 = vunpack.c.l.b16 %v69
    %v115 = vunpack.c.h.b16 %v69
    %v116 = vunpack.c.l.b16 %v70
    %v117 = vunpack.c.h.b16 %v70
    %v118 = vunpack.c.l.b16 %v71
    %v119 = vunpack.c.h.b16 %v71
    %v120 = vunpack.c.l.b16 %v72
    %v121 = vunpack.c.h.b16 %v72
    %v122 = vunpack.c.l.b16 %v73
    %v123 = vunpack.c.h.b16 %v73
    %v124 = vunpack.c.l.b16 %v74
    %v125 = vunpack.c.h.b16 %v74
    %v126 = vunpack.c.l.b16 %v75
    %v127 = vunpack.c.h.b16 %v75
    %v128 = vunpack.c.l.b16 %v76
    %v129 = vunpack.c.h.b16 %v76
    %v130 = vunpack.c.l.b16 %v77
    %v131 = vunpack.c.h.b16 %v77
    %v132 = vunpack.c.l.b16 %v78
    %v133 = vunpack.c.h.b16 %v78
    %v134 = vunpack.c.l.b16 %v79
    %v135 = vunpack.c.h.b16 %v79
    %v136 = vunpack.c.l.b16 %v80
    %v137 = vunpack.c.h.b16 %v80
    %v138 = vunpack.c.l.b16 %v81
    %v139 = vunpack.c.h.b16 %v81
    %v140 = vunpack.c.l.b16 %v82
    %v141 = vunpack.c.h.b16 %v82
    %v142 = vunpack.c.l.b16 %v83
    %v143 = vunpack.c.h.b16 %v83
    %v144 = vpack.c.b16 %v114, %v112
    %v145 = vpack.c.b16 %v115, %v113
    %v146 = vpack.c.b16 %v118, %v116
    %v147 = vpack.c.b16 %v119, %v117
    %v148 = vpack.c.b16 %v122, %v120
    %v149 = vpack.c.b16 %v123, %v121
    %v150 = vpack.c.b16 %v126, %v124
    %v151 = vpack.c.b16 %v127, %v125
    %v152 = vpack.c.b16 %v130, %v128
    %v153 = vpack.c.b16 %v131, %v129
    %v154 = vpack.c.b16 %v134, %v132
    %v155 = vpack.c.b16 %v135, %v133
    %v156 = vpack.c.b16 %v138, %v136
    %v157 = vpack.c.b16 %v139, %v137
    %v158 = vpack.c.b16 %v142, %v140
    %v159 = vpack.c.b16 %v143, %v141
    %176 = vmatprep.subr.bf16.mxu0 %v159
    %177 = vmatpush1.bf16.msra.mxu0 %v158
    %178 = vmatprep.subr.bf16.mxu0 %v157
    %179 = vmatpush1.bf16.msra.mxu0 %v156
    %180 = vmatprep.subr.bf16.mxu0 %v155
    %181 = vmatpush1.bf16.msra.mxu0 %v154
    %182 = vmatprep.subr.bf16.mxu0 %v153
    %183 = vmatpush1.bf16.msra.mxu0 %v152
    %184 = vmatprep.subr.bf16.mxu0 %v151
    %185 = vmatpush1.bf16.msra.mxu0 %v150
    %186 = vmatprep.subr.bf16.mxu0 %v149
    %187 = vmatpush1.bf16.msra.mxu0 %v148
    %188 = vmatprep.subr.bf16.mxu0 %v147
    %189 = vmatpush1.bf16.msra.mxu0 %v146
    %190 = vmatprep.subr.bf16.mxu0 %v145
    %191 = vmatpush1.bf16.msra.mxu0 %v144
    %192 = vmatprep.subr.bf16.mxu0 0
    %193 = vmatpush2.bf16.msra.mxu0 0
    %194 = vmatprep.subr.bf16.mxu0 0
    %195 = vmatpush2.bf16.msra.mxu0 0
    %196 = vmatprep.subr.bf16.mxu0 0
    %197 = vmatpush2.bf16.msra.mxu0 0
    %198 = vmatprep.subr.bf16.mxu0 0
    %199 = vmatpush2.bf16.msra.mxu0 0
    %200 = vmatprep.subr.bf16.mxu0 0
    %201 = vmatpush2.bf16.msra.mxu0 0
    %202 = vmatprep.subr.bf16.mxu0 0
    %203 = vmatpush2.bf16.msra.mxu0 0
    %204 = vmatprep.subr.bf16.mxu0 0
    %205 = vmatpush2.bf16.msra.mxu0 0
    %206 = vmatprep.subr.bf16.mxu0 0
    %207 = vmatpush2.bf16.msra.mxu0 0
    %208 = vmatprep.mubr.bf16.mxu0 0
    %209 = vmatmul.mubr.bf16.gmra.mxu0 %v67
    %v210 = vpop.f32.mrf.mxu0
    %v211 = vadd.f32 %v89, %v210
    %v212 = vpop.f32.mrf.mxu0
    %v213 = vadd.f32 %v93, %v212
    %v214 = vpop.f32.mrf.mxu0
    %v215 = vpop.f32.mrf.mxu0
    %216 = vdwg.mxu0
    %v217 = vmul.f32 %v211, 0.2
    %v218 = vmul.f32 %v213, 0.2
    %v219 = vmax.f32 %v211, %v217
    %v220 = vmax.f32 %v213, %v218
    %v221 = vpack.c.bf16 %v219, %v219
    %v222 = vpack.c.bf16 %v220, %v220
    %v223 = vld [vmem:[#allocation7] sm:$0xff]
    %v224 = vld [vmem:[#allocation7 + $0x8] sm:$0xff]
    %v225 = vld [vmem:[#allocation7 + $0x10] sm:$0xff]
    %v226 = vld [vmem:[#allocation7 + $0x18] sm:$0xff]
    %v227 = vld [vmem:[#allocation7 + $0x20] sm:$0xff]
    %v228 = vld [vmem:[#allocation7 + $0x28] sm:$0xff]
    %v229 = vld [vmem:[#allocation7 + $0x30] sm:$0xff]
    %v230 = vld [vmem:[#allocation7 + $0x38] sm:$0xff]
    %v231 = vld [vmem:[#allocation7 + $0x40] sm:$0xff]
    %v232 = vld [vmem:[#allocation7 + $0x48] sm:$0xff]
    %v233 = vld [vmem:[#allocation7 + $0x50] sm:$0xff]
    %v234 = vld [vmem:[#allocation7 + $0x58] sm:$0xff]
    %v235 = vld [vmem:[#allocation7 + $0x60] sm:$0xff]
    %v236 = vld [vmem:[#allocation7 + $0x68] sm:$0xff]
    %v237 = vld [vmem:[#allocation7 + $0x70] sm:$0xff]
    %v238 = vld [vmem:[#allocation7 + $0x78] sm:$0xff]
    %v239 = vld [vmem:[#allocation7 + $0x80] sm:$0xff]
    %v240 = vld [vmem:[#allocation7 + $0x88] sm:$0xff]
    %v241 = vld [vmem:[#allocation7 + $0x90] sm:$0xff]
    %v242 = vld [vmem:[#allocation7 + $0x98] sm:$0xff]
    %v243 = vld [vmem:[#allocation7 + $0xa0] sm:$0xff]
    %v244 = vld [vmem:[#allocation7 + $0xa8] sm:$0xff]
    %v245 = vld [vmem:[#allocation7 + $0xb0] sm:$0xff]
    %v246 = vld [vmem:[#allocation7 + $0xb8] sm:$0xff]
    %v247 = vld [vmem:[#allocation7 + $0xc0] sm:$0xff]
    %v248 = vld [vmem:[#allocation7 + $0xc8] sm:$0xff]
    %v249 = vld [vmem:[#allocation7 + $0xd0] sm:$0xff]
    %v250 = vld [vmem:[#allocation7 + $0xd8] sm:$0xff]
    %v251 = vld [vmem:[#allocation7 + $0xe0] sm:$0xff]
    %v252 = vld [vmem:[#allocation7 + $0xe8] sm:$0xff]
    %v253 = vld [vmem:[#allocation7 + $0xf0] sm:$0xff]
    %v254 = vld [vmem:[#allocation7 + $0xf8] sm:$0xff]
    %v255 = vld [vmem:[%s4] sm:$0x3]
    %v257 = vlaneseq
    %v258 = vshrl.u32 %v257, 7
    %v259 = vsub.s32 0, %v258
    %v260 = vrot.slane %v255, %v259
    %v261 = vlaneseq
    %v262 = vshrl.u32 %v261, 7
    %v263 = vsub.s32 1, %v262
    %v264 = vrot.slane %v255, %v263
    %v299 = vunpack.c.l.b16 %v223
    %v300 = vunpack.c.h.b16 %v223
    %v301 = vunpack.c.l.b16 %v224
    %v302 = vunpack.c.h.b16 %v224
    %v303 = vunpack.c.l.b16 %v225
    %v304 = vunpack.c.h.b16 %v225
    %v305 = vunpack.c.l.b16 %v226
    %v306 = vunpack.c.h.b16 %v226
    %v307 = vunpack.c.l.b16 %v227
    %v308 = vunpack.c.h.b16 %v227
    %v309 = vunpack.c.l.b16 %v228
    %v310 = vunpack.c.h.b16 %v228
    %v311 = vunpack.c.l.b16 %v229
    %v312 = vunpack.c.h.b16 %v229
    %v313 = vunpack.c.l.b16 %v230
    %v314 = vunpack.c.h.b16 %v230
    %v315 = vunpack.c.l.b16 %v231
    %v316 = vunpack.c.h.b16 %v231
    %v317 = vunpack.c.l.b16 %v232
    %v318 = vunpack.c.h.b16 %v232
    %v319 = vunpack.c.l.b16 %v233
    %v320 = vunpack.c.h.b16 %v233
    %v321 = vunpack.c.l.b16 %v234
    %v322 = vunpack.c.h.b16 %v234
    %v323 = vunpack.c.l.b16 %v235
    %v324 = vunpack.c.h.b16 %v235
    %v325 = vunpack.c.l.b16 %v236
    %v326 = vunpack.c.h.b16 %v236
    %v327 = vunpack.c.l.b16 %v237
    %v328 = vunpack.c.h.b16 %v237
    %v329 = vunpack.c.l.b16 %v238
    %v330 = vunpack.c.h.b16 %v238
    %v331 = vunpack.c.l.b16 %v239
    %v332 = vunpack.c.h.b16 %v239
    %v333 = vunpack.c.l.b16 %v240
    %v334 = vunpack.c.h.b16 %v240
    %v335 = vunpack.c.l.b16 %v241
    %v336 = vunpack.c.h.b16 %v241
    %v337 = vunpack.c.l.b16 %v242
    %v338 = vunpack.c.h.b16 %v242
    %v339 = vunpack.c.l.b16 %v243
    %v340 = vunpack.c.h.b16 %v243
    %v341 = vunpack.c.l.b16 %v244
    %v342 = vunpack.c.h.b16 %v244
    %v343 = vunpack.c.l.b16 %v245
    %v344 = vunpack.c.h.b16 %v245
    %v345 = vunpack.c.l.b16 %v246
    %v346 = vunpack.c.h.b16 %v246
    %v347 = vunpack.c.l.b16 %v247
    %v348 = vunpack.c.h.b16 %v247
    %v349 = vunpack.c.l.b16 %v248
    %v350 = vunpack.c.h.b16 %v248
    %v351 = vunpack.c.l.b16 %v249
    %v352 = vunpack.c.h.b16 %v249
    %v353 = vunpack.c.l.b16 %v250
    %v354 = vunpack.c.h.b16 %v250
    %v355 = vunpack.c.l.b16 %v251
    %v356 = vunpack.c.h.b16 %v251
    %v357 = vunpack.c.l.b16 %v252
    %v358 = vunpack.c.h.b16 %v252
    %v359 = vunpack.c.l.b16 %v253
    %v360 = vunpack.c.h.b16 %v253
    %v361 = vunpack.c.l.b16 %v254
    %v362 = vunpack.c.h.b16 %v254
    %v363 = vpack.c.b16 %v301, %v299
    %v364 = vpack.c.b16 %v302, %v300
    %v365 = vpack.c.b16 %v305, %v303
    %v366 = vpack.c.b16 %v306, %v304
    %v367 = vpack.c.b16 %v309, %v307
    %v368 = vpack.c.b16 %v310, %v308
    %v369 = vpack.c.b16 %v313, %v311
    %v370 = vpack.c.b16 %v314, %v312
    %v371 = vpack.c.b16 %v317, %v315
    %v372 = vpack.c.b16 %v318, %v316
    %v373 = vpack.c.b16 %v321, %v319
    %v374 = vpack.c.b16 %v322, %v320
    %v375 = vpack.c.b16 %v325, %v323
    %v376 = vpack.c.b16 %v326, %v324
    %v377 = vpack.c.b16 %v329, %v327
    %v378 = vpack.c.b16 %v330, %v328
    %v379 = vpack.c.b16 %v333, %v331
    %v380 = vpack.c.b16 %v334, %v332
    %v381 = vpack.c.b16 %v337, %v335
    %v382 = vpack.c.b16 %v338, %v336
    %v383 = vpack.c.b16 %v341, %v339
    %v384 = vpack.c.b16 %v342, %v340
    %v385 = vpack.c.b16 %v345, %v343
    %v386 = vpack.c.b16 %v346, %v344
    %v387 = vpack.c.b16 %v349, %v347
    %v388 = vpack.c.b16 %v350, %v348
    %v389 = vpack.c.b16 %v353, %v351
    %v390 = vpack.c.b16 %v354, %v352
    %v391 = vpack.c.b16 %v357, %v355
    %v392 = vpack.c.b16 %v358, %v356
    %v393 = vpack.c.b16 %v361, %v359
    %v394 = vpack.c.b16 %v362, %v360
    %427 = vmatprep.subr.bf16.mxu0 %v378
    %428 = vmatpush1.bf16.msra.mxu0 %v377
    %429 = vmatprep.subr.bf16.mxu0 %v376
    %430 = vmatpush1.bf16.msra.mxu0 %v375
    %431 = vmatprep.subr.bf16.mxu0 %v374
    %432 = vmatpush1.bf16.msra.mxu0 %v373
    %433 = vmatprep.subr.bf16.mxu0 %v372
    %434 = vmatpush1.bf16.msra.mxu0 %v371
    %435 = vmatprep.subr.bf16.mxu0 %v370
    %436 = vmatpush1.bf16.msra.mxu0 %v369
    %437 = vmatprep.subr.bf16.mxu0 %v368
    %438 = vmatpush1.bf16.msra.mxu0 %v367
    %439 = vmatprep.subr.bf16.mxu0 %v366
    %440 = vmatpush1.bf16.msra.mxu0 %v365
    %441 = vmatprep.subr.bf16.mxu0 %v364
    %442 = vmatpush1.bf16.msra.mxu0 %v363
    %443 = vmatprep.subr.bf16.mxu0 %v394
    %444 = vmatpush2.bf16.msra.mxu0 %v393
    %445 = vmatprep.subr.bf16.mxu0 %v392
    %446 = vmatpush2.bf16.msra.mxu0 %v391
    %447 = vmatprep.subr.bf16.mxu0 %v390
    %448 = vmatpush2.bf16.msra.mxu0 %v389
    %449 = vmatprep.subr.bf16.mxu0 %v388
    %450 = vmatpush2.bf16.msra.mxu0 %v387
    %451 = vmatprep.subr.bf16.mxu0 %v386
    %452 = vmatpush2.bf16.msra.mxu0 %v385
    %453 = vmatprep.subr.bf16.mxu0 %v384
    %454 = vmatpush2.bf16.msra.mxu0 %v383
    %455 = vmatprep.subr.bf16.mxu0 %v382
    %456 = vmatpush2.bf16.msra.mxu0 %v381
    %457 = vmatprep.subr.bf16.mxu0 %v380
    %458 = vmatpush2.bf16.msra.mxu0 %v379
    %459 = vmatprep.mubr.bf16.mxu0 %v222
    %460 = vmatmul.mubr.bf16.gmra.mxu0 %v221
    %v461 = vpop.f32.mrf.mxu0
    %v462 = vadd.f32 %v260, %v461
    %v463 = vpop.f32.mrf.mxu0
    %v464 = vadd.f32 %v264, %v463
    %v465 = vpop.f32.mrf.mxu0
    %v466 = vpop.f32.mrf.mxu0
    %467 = vdwg.mxu0
    %v468 = vmul.f32 %v462, 0.2
    %v469 = vmul.f32 %v464, 0.2
    %v470 = vmax.f32 %v462, %v468
    %v471 = vmax.f32 %v464, %v469
    %v472 = vld [vmem:[%s5] sm:$0x3]
    %v474 = vlaneseq
    %v475 = vshrl.u32 %v474, 7
    %v476 = vsub.s32 0, %v475
    %v477 = vrot.slane %v472, %v476
    %v478 = vlaneseq
    %v479 = vshrl.u32 %v478, 7
    %v480 = vsub.s32 1, %v479
    %v481 = vrot.slane %v472, %v480
    %v484 = vmul.f32 %v470, %v477
    %v485 = vmul.f32 %v471, %v481
    %v486 = vadd.f32 %v484, %v485
    %487 = vadd.xlane.f32.xlu0 %v486
    %v488 = vpop.xlane.xlu0 %487
    %s489 = sld [smem:[#allocation2]]
    %v490 = vstv %s489
    %v491 = vadd.f32 %v488, %v490
    %vm492 = vcmask 7168
    %493 = vst.msk [vmem:[%s7] sm:$0xff] %vm492, %v491
    // Predicated region
    $region42: #{tpu_custom_call.1} parent=1 // pred_check
      _
    $region43: #{tpu_custom_call.1} parent=1 // pred_check_branch
      %495 = sbr.rel (0) target = $region45
    $region44: #{tpu_custom_call.1} parent=1 // pred_region
      _
    $region45: #{tpu_custom_call.1} parent=1 // pred_fallthru
      _
    // Predicated region
    $region46: #{tpu_custom_call.1} parent=1 // pred_check
      _
    $region47: #{tpu_custom_call.1} parent=1 // pred_check_branch
      %497 = sbr.rel (0) target = $region49
    $region48: #{tpu_custom_call.1} parent=1 // pred_region
      _
    $region49: #{tpu_custom_call.1} parent=1 // pred_fallthru
      _
    %498 = vsyncpa [#allocation4], 1
    %499 = vsyncpa [#allocation6], 1

</llo_original>
